<compile_context>
chip_gen: v7x
topology: tpu7x:2x2x1
jax: 0.10.0
libtpu: 0.0.40
codegen_flags: <defaults>
</compile_context>

<pallas_src>
import functools
import math

import jax
import jax.numpy as jnp
from jax import lax
from jax.experimental import pallas as pl
from jax.experimental.pallas import tpu as pltpu


COMPUTE_DTYPE = jnp.bfloat16


def _row_tile(m, target=512):
    """Largest row-tile <= target that evenly divides m (multiple of 8), else m."""
    if m <= target:
        return m
    t = target
    while t >= 8:
        if m % t == 0:
            return t
        t -= 8
    return m


def _nbytes(shape, dtype):
    n = 1
    for s in shape:
        n *= int(s)
    return n * jnp.dtype(dtype).itemsize


def _cparams(semantics, est_bytes):
    """CompilerParams with dimension semantics + explicit VMEM limit from block sizes."""
    vmem = min(2 * int(est_bytes) + (8 << 20), 64 << 20)
    return pltpu.CompilerParams(dimension_semantics=semantics,
                                vmem_limit_bytes=vmem)


# ----------------------------------------------------------------------------
# Kernels
# ----------------------------------------------------------------------------
def _proj_kernel(x_ref, w_ref, b_ref, *o_refs):
    # x: (tm, E) bf16; w: (E, N) bf16 lane-dense (heads packed along lanes); b: (1, N) f32.
    # Writes N//n_out wide slabs (Q / K / V ...), each lane-dense w.r.t. its own array.
    y = jnp.dot(x_ref[...], w_ref[...], preferred_element_type=jnp.float32)
    y = y + b_ref[...].astype(jnp.float32)
    eo = o_refs[0].shape[-1]
    for i, o_ref in enumerate(o_refs):
        o_ref[...] = y[:, i * eo:(i + 1) * eo].astype(o_ref.dtype)


def _attn_kernel(*refs, nhead, causal, has_mask, eps):
    # Flash-style attention over S tiles with fused output projection + residual + LN.
    if has_mask:
        (q_ref, k_ref, v_ref, wo_ref, bo_ref, res_ref, g_ref, bln_ref, msk_ref,
         o_ref, acc_sc, ctx_sc, m_sc, l_sc) = refs
    else:
        (q_ref, k_ref, v_ref, wo_ref, bo_ref, res_ref, g_ref, bln_ref,
         o_ref, acc_sc, ctx_sc, m_sc, l_sc) = refs

    si = pl.program_id(2)
    n_s = pl.num_programs(2)

    @pl.when(si == 0)
    def _():
        acc_sc[...] = jnp.zeros_like(acc_sc)
        l_sc[...] = jnp.zeros_like(l_sc)
        m_sc[...] = jnp.full_like(m_sc, -jnp.inf)

    q = q_ref[...]                     # (tq, E) bf16, 1/sqrt(d) pre-folded into Wq
    k = k_ref[...]                     # (ts, E) bf16
    v = v_ref[...]                     # (ts, E) bf16
    tq, E = q.shape
    ts = k.shape[0]
    d = E // nhead

    if causal:
        qi = pl.program_id(1)
        row = lax.broadcasted_iota(jnp.int32, (tq, ts), 0) + qi * tq
        col = lax.broadcasted_iota(jnp.int32, (tq, ts), 1) + si * ts
        allow = col <= row
    elif has_mask:
        bias = msk_ref[...].astype(jnp.float32)

    # TODO(synk): for causal self-attention, fully-masked S tiles (si*ts > qi*tq + tq - 1)
    # could be skipped entirely with a pl.when guard around the head loop.
    for h in range(nhead):
        qh = q[:, h * d:(h + 1) * d]
        kh = k[:, h * d:(h + 1) * d]
        vh = v[:, h * d:(h + 1) * d]
        s_h = lax.dot_general(qh, kh, (((1,), (1,)), ((), ())),
                              preferred_element_type=jnp.float32)        # (tq, ts)
        if causal:
            s_h = jnp.where(allow, s_h, -1e30)
        elif has_mask:
            s_h = s_h + bias

        m_prev = m_sc[:, h:h + 1]                                        # (tq, 1)
        l_prev = l_sc[:, h:h + 1]
        m_new = jnp.maximum(m_prev, jnp.max(s_h, axis=-1, keepdims=True))
        alpha = jnp.exp(m_prev - m_new)
        p = jnp.exp(s_h - m_new)
        l_sc[:, h:h + 1] = alpha * l_prev + jnp.sum(p, axis=-1, keepdims=True)
        m_sc[:, h:h + 1] = m_new
        acc_sc[:, h * d:(h + 1) * d] = alpha * acc_sc[:, h * d:(h + 1) * d] + jnp.dot(
            p.astype(vh.dtype), vh, preferred_element_type=jnp.float32)

    @pl.when(si == n_s - 1)
    def _():
        # normalize per head, pack lane-dense ctx (tq, E), then fused Wo + residual + LN
        for h in range(nhead):
            inv = pl.reciprocal(l_sc[:, h:h + 1], approx=True)           # EUP, not VALU
            ctx_sc[:, h * d:(h + 1) * d] = (
                acc_sc[:, h * d:(h + 1) * d] * inv).astype(ctx_sc.dtype)
        y = jnp.dot(ctx_sc[...], wo_ref[...], preferred_element_type=jnp.float32)
        y = y + bo_ref[...].astype(jnp.float32) + res_ref[...].astype(jnp.float32)
        mu = jnp.mean(y, axis=-1, keepdims=True)
        var = jnp.mean(jnp.square(y - mu), axis=-1, keepdims=True)
        o_ref[...] = ((y - mu) * lax.rsqrt(var + eps)
                      * g_ref[...].astype(jnp.float32)
                      + bln_ref[...].astype(jnp.float32)).astype(o_ref.dtype)


def _ffn_kernel(x_ref, w1_ref, b1_ref, w2_ref, b2_ref, g_ref, bln_ref, o_ref, *, eps):
    # Fused lin1 + ReLU + lin2 + residual + LayerNorm. x: (tm, E) bf16.
    x = x_ref[...]
    h = jnp.dot(x, w1_ref[...], preferred_element_type=jnp.float32)
    h = h + b1_ref[...].astype(jnp.float32)
    h = jnp.maximum(h, 0.0).astype(x.dtype)            # back to bf16 for 2nd MXU pass
    y = jnp.dot(h, w2_ref[...], preferred_element_type=jnp.float32)
    y = y + b2_ref[...].astype(jnp.float32) + x.astype(jnp.float32)
    mu = jnp.mean(y, axis=-1, keepdims=True)
    var = jnp.mean(jnp.square(y - mu), axis=-1, keepdims=True)
    o_ref[...] = ((y - mu) * lax.rsqrt(var + eps)
                  * g_ref[...].astype(jnp.float32)
                  + bln_ref[...].astype(jnp.float32)).astype(o_ref.dtype)


def _ln_kernel(x_ref, g_ref, b_ref, o_ref, *, eps):
    h = x_ref[...].astype(jnp.float32)
    mu = jnp.mean(h, axis=-1, keepdims=True)
    var = jnp.mean(jnp.square(h - mu), axis=-1, keepdims=True)
    o_ref[...] = ((h - mu) * lax.rsqrt(var + eps)
                  * g_ref[...].astype(jnp.float32)
                  + b_ref[...].astype(jnp.float32)).astype(o_ref.dtype)


# ----------------------------------------------------------------------------
# pallas_call wrappers
# ----------------------------------------------------------------------------
def fused_projection(x, w, b, n_out):
    """x: (M, E) bf16; w: (E, N) bf16 lane-dense; b: (1, N) f32. Returns n_out (M, N/n_out) slabs."""
    M, E = x.shape
    N = w.shape[-1]
    eo = N // n_out
    tm = _row_tile(M)
    est = (2 * _nbytes((tm, E), x.dtype) + _nbytes(w.shape, w.dtype)
           + _nbytes(b.shape, b.dtype)
           + 2 * n_out * _nbytes((tm, eo), x.dtype) + _nbytes((tm, N), jnp.float32))
    outs = pl.pallas_call(
        _proj_kernel,
        out_shape=tuple(jax.ShapeDtypeStruct((M, eo), x.dtype) for _ in range(n_out)),
        grid=(M // tm,),
        in_specs=[pl.BlockSpec((tm, E), lambda m: (m, 0)),
                  pl.BlockSpec((E, N), lambda m: (0, 0), pipeline_mode=pl.Buffered(1)),
                  pl.BlockSpec((1, N), lambda m: (0, 0), pipeline_mode=pl.Buffered(1))],
        out_specs=tuple(pl.BlockSpec((tm, eo), lambda m: (m, 0)) for _ in range(n_out)),
        compiler_params=_cparams(("parallel",), est),
    )(x, w, b)
    return outs if n_out > 1 else outs[0]


def attention_block(q, k, v, res, wo, bo, g, bln, *, B, T, S, nhead,
                    mask=None, eps=1e-5):
    """Multi-head attention with fused output projection + residual + LayerNorm.
    q/res: (B*T, E); k/v: (B*S, E); wo: (E, E); bo/g/bln: (1, E). mask: None|"causal"|(T,S)."""
    E = q.shape[-1]
    tq = _row_tile(T, 256)
    ts = _row_tile(S, 512)
    n_q = T // tq
    n_s = S // ts
    causal = isinstance(mask, str)
    has_mask = (mask is not None) and not causal

    in_specs = [
        pl.BlockSpec((tq, E), lambda b, qi, si: (b * n_q + qi, 0)),   # q
        pl.BlockSpec((ts, E), lambda b, qi, si: (b * n_s + si, 0)),   # k
        pl.BlockSpec((ts, E), lambda b, qi, si: (b * n_s + si, 0)),   # v
        pl.BlockSpec((E, E), lambda b, qi, si: (0, 0),
                     pipeline_mode=pl.Buffered(1)),                   # wo (resident)
        pl.BlockSpec((1, E), lambda b, qi, si: (0, 0)),               # bo
        pl.BlockSpec((tq, E), lambda b, qi, si: (b * n_q + qi, 0)),   # residual
        pl.BlockSpec((1, E), lambda b, qi, si: (0, 0)),               # ln gamma
        pl.BlockSpec((1, E), lambda b, qi, si: (0, 0)),               # ln beta
    ]
    args = [q, k, v, wo, bo, res, g, bln]
    if has_mask:
        in_specs.append(pl.BlockSpec((tq, ts), lambda b, qi, si: (qi, si)))
        args.append(mask.astype(jnp.float32))

    est = (3 * 2 * _nbytes((tq, E), q.dtype) + 2 * 2 * _nbytes((ts, E), k.dtype)
           + _nbytes((E, E), wo.dtype) + 3 * _nbytes((1, E), jnp.float32)
           + 2 * _nbytes((tq, E), jnp.float32)         # acc + ctx scratch
           + 2 * _nbytes((tq, 128), jnp.float32)       # m / l scratch (lane-padded)
           + 3 * _nbytes((tq, ts), jnp.float32))       # per-head score temporaries
    if has_mask:
        est += 2 * _nbytes((tq, ts), jnp.float32)

    return pl.pallas_call(
        functools.partial(_attn_kernel, nhead=nhead, causal=causal,
                          has_mask=has_mask, eps=eps),
        out_shape=jax.ShapeDtypeStruct(res.shape, res.dtype),
        grid=(B, n_q, n_s),
        in_specs=in_specs,
        out_specs=pl.BlockSpec((tq, E), lambda b, qi, si: (b * n_q + qi, 0)),
        scratch_shapes=[pltpu.VMEM((tq, E), jnp.float32),       # per-head ctx accumulators
                        pltpu.VMEM((tq, E), COMPUTE_DTYPE),     # normalized ctx
                        pltpu.VMEM((tq, nhead), jnp.float32),   # running max per head
                        pltpu.VMEM((tq, nhead), jnp.float32)],  # running denom per head
        compiler_params=_cparams(("parallel", "parallel", "arbitrary"), est),
    )(*args)


def ffn_block(x, w1, b1, w2, b2, g, bln, eps=1e-5):
    """Fused lin1 + ReLU + lin2 + residual + LayerNorm. x: (M, E); w1: (E, F); w2: (F, E)."""
    M, E = x.shape
    F = w1.shape[-1]
    tm = _row_tile(M)
    # TODO(synk): for very large F, add a K-tiled accumulation grid axis over F; at these
    # sizes the resident single-buffered weights fit VMEM comfortably.
    est = (2 * 2 * _nbytes((tm, E), x.dtype) + _nbytes((E, F), w1.dtype)
           + _nbytes((F, E), w2.dtype) + _nbytes((1, F), jnp.float32)
           + 3 * _nbytes((1, E), jnp.float32)
           + _nbytes((tm, F), jnp.float32) + 2 * _nbytes((tm, E), jnp.float32))
    return pl.pallas_call(
        functools.partial(_ffn_kernel, eps=eps),
        out_shape=jax.ShapeDtypeStruct((M, E), x.dtype),
        grid=(M // tm,),
        in_specs=[pl.BlockSpec((tm, E), lambda m: (m, 0)),
                  pl.BlockSpec((E, F), lambda m: (0, 0), pipeline_mode=pl.Buffered(1)),
                  pl.BlockSpec((1, F), lambda m: (0, 0)),
                  pl.BlockSpec((F, E), lambda m: (0, 0), pipeline_mode=pl.Buffered(1)),
                  pl.BlockSpec((1, E), lambda m: (0, 0)),
                  pl.BlockSpec((1, E), lambda m: (0, 0)),
                  pl.BlockSpec((1, E), lambda m: (0, 0))],
        out_specs=pl.BlockSpec((tm, E), lambda m: (m, 0)),
        compiler_params=_cparams(("parallel",), est),
    )(x, w1, b1, w2, b2, g, bln)


def layernorm(x, g, b, eps=1e-5):
    """Plain LayerNorm (final decoder norm). x: (M, E)."""
    M, E = x.shape
    tm = _row_tile(M)
    est = (2 * 2 * _nbytes((tm, E), x.dtype) + 2 * _nbytes((1, E), jnp.float32)
           + 2 * _nbytes((tm, E), jnp.float32))
    return pl.pallas_call(
        functools.partial(_ln_kernel, eps=eps),
        out_shape=jax.ShapeDtypeStruct((M, E), x.dtype),
        grid=(M // tm,),
        in_specs=[pl.BlockSpec((tm, E), lambda m: (m, 0)),
                  pl.BlockSpec((1, E), lambda m: (0, 0)),
                  pl.BlockSpec((1, E), lambda m: (0, 0))],
        out_specs=pl.BlockSpec((tm, E), lambda m: (m, 0)),
        compiler_params=_cparams(("parallel",), est),
    )(x, g, b)


# ----------------------------------------------------------------------------
# Decoder layer / stack
# ----------------------------------------------------------------------------
def decoder_layer(x, mem, p, nhead, B, T, S, target_mask=None, memory_mask=None):
    """x: (B*T, E) bf16 batch-major rows; mem: (B*S, E). Returns (B*T, E)."""
    # self-attention: lane-dense fused QKV projection, attention with fused
    # output-projection + residual + LayerNorm epilogue.
    q, k, v = fused_projection(x, p["sa"]["w_qkv"], p["sa"]["b_qkv"], 3)
    x = attention_block(q, k, v, x, p["sa"]["wo"], p["sa"]["bo"],
                        p["norm1_g"], p["norm1_b"], B=B, T=T, S=T,
                        nhead=nhead, mask=target_mask)

    # cross-attention: Q from x, fused KV from memory.
    q = fused_projection(x, p["ca"]["w_q"], p["ca"]["b_q"], 1)
    k, v = fused_projection(mem, p["ca"]["w_kv"], p["ca"]["b_kv"], 2)
    x = attention_block(q, k, v, x, p["ca"]["wo"], p["ca"]["bo"],
                        p["norm2_g"], p["norm2_b"], B=B, T=T, S=S,
                        nhead=nhead, mask=memory_mask)

    # feed-forward block (fused with residual + LN; dropout = identity at inference).
    x = ffn_block(x, p["w1"], p["b1"], p["w2"], p["b2"], p["norm3_g"], p["norm3_b"])
    return x


def transformer_decoder(target, memory, layer_params, nhead, final_norm=None,
                        target_mask=None, memory_mask=None):
    """target: (T, B, E); memory: (S, B, E). target_mask/memory_mask: None | "causal" | (T,S) float.
    Mirrors torch TransformerDecoder (post-norm layers) forward semantics."""
    # TODO(synk): key_padding_mask arguments of the torch module are only supported as None.
    T, B, E = target.shape
    S = memory.shape[0]

    # single layout change to batch-major rows (and bf16 compute dtype) for the whole stack
    x = jnp.transpose(target, (1, 0, 2)).reshape(B * T, E).astype(COMPUTE_DTYPE)
    mem = jnp.transpose(memory, (1, 0, 2)).reshape(B * S, E).astype(COMPUTE_DTYPE)

    for p in layer_params:
        x = decoder_layer(x, mem, p, nhead, B, T, S,
                          target_mask=target_mask, memory_mask=memory_mask)

    if final_norm is not None:
        x = layernorm(x, final_norm["g"], final_norm["b"])

    out = jnp.transpose(x.reshape(B, T, E), (1, 0, 2))
    return out.astype(target.dtype)


# ----------------------------------------------------------------------------
# Deterministic parameter construction (lane-dense, pre-cast, scale pre-folded)
# ----------------------------------------------------------------------------
def make_attn_params(key, E, nhead, cross=False):
    d = E // nhead
    scale = 1.0 / math.sqrt(d)      # folded into the Q projection (and its bias)
    k1, k2, k3, k4 = jax.random.split(key, 4)
    w_q = 0.05 * scale * jax.random.normal(k1, (E, E), jnp.float32)
    w_k = 0.05 * jax.random.normal(k2, (E, E), jnp.float32)
    w_v = 0.05 * jax.random.normal(k3, (E, E), jnp.float32)
    wo = 0.05 * jax.random.normal(k4, (E, E), jnp.float32)
    if cross:
        return {
            "w_q": w_q.astype(COMPUTE_DTYPE),
            "b_q": jnp.zeros((1, E), jnp.float32),
            "w_kv": jnp.concatenate([w_k, w_v], axis=1).astype(COMPUTE_DTYPE),
            "b_kv": jnp.zeros((1, 2 * E), jnp.float32),
            "wo": wo.astype(COMPUTE_DTYPE),
            "bo": jnp.zeros((1, E), jnp.float32),
        }
    return {
        "w_qkv": jnp.concatenate([w_q, w_k, w_v], axis=1).astype(COMPUTE_DTYPE),
        "b_qkv": jnp.zeros((1, 3 * E), jnp.float32),
        "wo": wo.astype(COMPUTE_DTYPE),
        "bo": jnp.zeros((1, E), jnp.float32),
    }


def make_layer_params(key, E, F, nhead):
    ks = jax.random.split(key, 4)
    return {
        "sa": make_attn_params(ks[0], E, nhead, cross=False),
        "ca": make_attn_params(ks[1], E, nhead, cross=True),
        "w1": (0.05 * jax.random.normal(ks[2], (E, F), jnp.float32)).astype(COMPUTE_DTYPE),
        "b1": jnp.zeros((1, F), jnp.float32),
        "w2": (0.05 * jax.random.normal(ks[3], (F, E), jnp.float32)).astype(COMPUTE_DTYPE),
        "b2": jnp.zeros((1, E), jnp.float32),
        "norm1_g": jnp.ones((1, E), jnp.float32), "norm1_b": jnp.zeros((1, E), jnp.float32),
        "norm2_g": jnp.ones((1, E), jnp.float32), "norm2_b": jnp.zeros((1, E), jnp.float32),
        "norm3_g": jnp.ones((1, E), jnp.float32), "norm3_b": jnp.zeros((1, E), jnp.float32),
    }


if __name__ == "__main__":
    T, S, B, E, H, F, L = 8, 8, 2, 32, 4, 64, 2

    root = jax.random.PRNGKey(0)
    k_tgt, k_mem, *k_layers = jax.random.split(root, 2 + L)

    target = jax.random.normal(k_tgt, (T, B, E), jnp.float32)   # (T, B, E)
    memory = jax.random.normal(k_mem, (S, B, E), jnp.float32)   # (S, B, E)

    layer_params = [make_layer_params(k, E, F, H) for k in k_layers]
    final_norm = {"g": jnp.ones((1, E), jnp.float32), "b": jnp.zeros((1, E), jnp.float32)}

    # causal target mask is generated inside the attention kernel (no HBM mask tensor);
    # memory_mask=None -> no mask work at all for cross-attention.
    out = transformer_decoder(target, memory, layer_params, H,
                              final_norm=final_norm,
                              target_mask="causal", memory_mask=None)
    out = jax.block_until_ready(out)
    assert out.shape == (T, B, E)
    assert out.dtype == jnp.float32
    assert bool(jnp.all(jnp.isfinite(out)))
    print("KERNEL_OK")
</pallas_src>

<mosaic_0001>
module attributes {stable_mosaic.version = 11 : i64} {
  func.func @_proj_kernel(%arg0: i32, %arg1: memref<16x32xbf16, #tpu.memory_space<vmem>>, %arg2: memref<32x96xbf16, #tpu.memory_space<vmem>>, %arg3: memref<1x96xf32, #tpu.memory_space<vmem>>, %arg4: memref<16x32xbf16, #tpu.memory_space<vmem>>, %arg5: memref<16x32xbf16, #tpu.memory_space<vmem>>, %arg6: memref<16x32xbf16, #tpu.memory_space<vmem>>) attributes {dimension_semantics = [#tpu.dimension_semantics<parallel>], iteration_bounds = array<i64: 1>, scalar_prefetch = 0 : i64, scratch_operands = 0 : i64, tpu.core_type = #tpu.core_type<tc>, window_params = [{transform_indices = @transform_0, window_bounds = array<i64: 16, 32>}, {pipeline_mode = #tpu.pipeline_mode<synchronous>, transform_indices = @transform_1, window_bounds = array<i64: 32, 96>}, {pipeline_mode = #tpu.pipeline_mode<synchronous>, transform_indices = @transform_2, window_bounds = array<i64: 1, 96>}, {transform_indices = @transform_3, window_bounds = array<i64: 16, 32>}, {transform_indices = @transform_4, window_bounds = array<i64: 16, 32>}, {transform_indices = @transform_5, window_bounds = array<i64: 16, 32>}]} {
    %c0 = arith.constant 0 : index
    %c0_0 = arith.constant 0 : index
    %0 = vector.load %arg1[%c0, %c0_0] : memref<16x32xbf16, #tpu.memory_space<vmem>>, vector<16x32xbf16>
    %c0_1 = arith.constant 0 : index
    %c0_2 = arith.constant 0 : index
    %1 = vector.load %arg2[%c0_1, %c0_2] : memref<32x96xbf16, #tpu.memory_space<vmem>>, vector<32x96xbf16>
    %cst = arith.constant dense<0.000000e+00> : vector<16x96xf32>
    %2 = tpu.matmul %0, %1, %cst {dimension_numbers = #tpu.dot_dimension_numbers<[1], [0], [0], [1], [0, 0, 1, 1], [], []>} : vector<16x32xbf16>, vector<32x96xbf16>, vector<16x96xf32> -> vector<16x96xf32>
    %c0_3 = arith.constant 0 : index
    %c0_4 = arith.constant 0 : index
    %3 = vector.load %arg3[%c0_3, %c0_4] : memref<1x96xf32, #tpu.memory_space<vmem>>, vector<1x96xf32>
    %4 = vector.broadcast %3 : vector<1x96xf32> to vector<16x96xf32>
    %5 = arith.addf %2, %4 : vector<16x96xf32>
    %6 = vector.extract_strided_slice %5 {offsets = [0, 0], sizes = [16, 32], strides = [1, 1]} : vector<16x96xf32> to vector<16x32xf32>
    %7 = arith.truncf %6 : vector<16x32xf32> to vector<16x32xbf16>
    %c0_5 = arith.constant 0 : index
    %c0_6 = arith.constant 0 : index
    %8 = vector.load %arg4[%c0_5, %c0_6] : memref<16x32xbf16, #tpu.memory_space<vmem>>, vector<16x32xbf16>
    tpu.vector_store %arg4[%c0_5, %c0_6], %7 {strides = array<i32>} : memref<16x32xbf16, #tpu.memory_space<vmem>>, vector<16x32xbf16>,
    %9 = vector.extract_strided_slice %5 {offsets = [0, 32], sizes = [16, 32], strides = [1, 1]} : vector<16x96xf32> to vector<16x32xf32>
    %10 = arith.truncf %9 : vector<16x32xf32> to vector<16x32xbf16>
    %c0_7 = arith.constant 0 : index
    %c0_8 = arith.constant 0 : index
    %11 = vector.load %arg5[%c0_7, %c0_8] : memref<16x32xbf16, #tpu.memory_space<vmem>>, vector<16x32xbf16>
    tpu.vector_store %arg5[%c0_7, %c0_8], %10 {strides = array<i32>} : memref<16x32xbf16, #tpu.memory_space<vmem>>, vector<16x32xbf16>,
    %12 = vector.extract_strided_slice %5 {offsets = [0, 64], sizes = [16, 32], strides = [1, 1]} : vector<16x96xf32> to vector<16x32xf32>
    %13 = arith.truncf %12 : vector<16x32xf32> to vector<16x32xbf16>
    %c0_9 = arith.constant 0 : index
    %c0_10 = arith.constant 0 : index
    %14 = vector.load %arg6[%c0_9, %c0_10] : memref<16x32xbf16, #tpu.memory_space<vmem>>, vector<16x32xbf16>
    tpu.vector_store %arg6[%c0_9, %c0_10], %13 {strides = array<i32>} : memref<16x32xbf16, #tpu.memory_space<vmem>>, vector<16x32xbf16>,
    return
  }
  func.func @transform_0(%arg0: i32) -> (i32, i32) {
    %c0_i32 = arith.constant 0 : i32
    %c0_i32_0 = arith.constant 0 : i32
    return %arg0, %c0_i32 : i32, i32
  }
  func.func @transform_1(%arg0: i32) -> (i32, i32) {
    %c0_i32 = arith.constant 0 : i32
    %c0_i32_0 = arith.constant 0 : i32
    %c0_i32_1 = arith.constant 0 : i32
    return %c0_i32, %c0_i32_0 : i32, i32
  }
  func.func @transform_2(%arg0: i32) -> (i32, i32) {
    %c0_i32 = arith.constant 0 : i32
    %c0_i32_0 = arith.constant 0 : i32
    %c0_i32_1 = arith.constant 0 : i32
    return %c0_i32, %c0_i32_0 : i32, i32
  }
  func.func @transform_3(%arg0: i32) -> (i32, i32) {
    %c0_i32 = arith.constant 0 : i32
    %c0_i32_0 = arith.constant 0 : i32
    return %arg0, %c0_i32 : i32, i32
  }
  func.func @transform_4(%arg0: i32) -> (i32, i32) {
    %c0_i32 = arith.constant 0 : i32
    %c0_i32_0 = arith.constant 0 : i32
    return %arg0, %c0_i32 : i32, i32
  }
  func.func @transform_5(%arg0: i32) -> (i32, i32) {
    %c0_i32 = arith.constant 0 : i32
    %c0_i32_0 = arith.constant 0 : i32
    return %arg0, %c0_i32 : i32, i32
  }
}

</mosaic_0001>

<llo_original>
// kernel: tpu_custom_call.1
$region0: #{tpu_custom_call.1}
  #allocation0 [shape = 'u32[]', space=smem, size = 0x4, offset = 0x4, fixed_abs, tag = 'smem constant byte address 0x4 - core index']
  #allocation1 [shape = 'u32[144,128]{1,0:T(1,128)}', space=vmem, size = 0x12000, scoped, tag = 'internal scratch']
  %s0 = inlined_call_operand.hbm [shape: bf16[16,32], index: 0, kind: input, shape index: {}]
  %s1 = inlined_call_operand.hbm [shape: bf16[32,96], index: 1, kind: input, shape index: {}]
  %s2 = inlined_call_operand.vmem [shape: f32[1,96], index: 2, kind: input, shape index: {}]
  %s3 = inlined_call_operand.hbm [shape: bf16[16,32], index: 3, kind: output, shape index: {0}]
  %s4 = inlined_call_operand.hbm [shape: bf16[16,32], index: 4, kind: output, shape index: {1}]
  %s5 = inlined_call_operand.hbm [shape: bf16[16,32], index: 5, kind: output, shape index: {2}]
  %6 = xla_tuple %s3, %s4, %s5
  %s7 = sld [smem:[#allocation0]]
  $region46: #{tpu_custom_call.1} parent=0
    _
  %s9 = ssub.s32 1, %s7
  %s10 = scalar_select 0, %s9, %s7
  $region1: #{tpu_custom_call.1} parent=0
    #allocation2 [shape = 'u8[4096]{0}', space=vmem, size = 0x1000, scoped, tag = 'input window, operand 0, single buffered']
    #allocation3 [shape = 's32[1]{0}', space=sflag, size = 0x4, scoped, tag = 'scoped memory for tpu_custom_call.1']
    #allocation4 [shape = 's32[1]{0}', space=sflag, size = 0x4, scoped, tag = 'scoped memory for tpu_custom_call.1']
    #allocation5 [shape = 'u8[8192]{0}', space=vmem, size = 0x2000, scoped, tag = 'input window, operand 1, single buffered']
    #allocation6 [shape = 's32[1]{0}', space=sflag, size = 0x4, scoped, tag = 'scoped memory for tpu_custom_call.1']
    #allocation7 [shape = 'u8[4096]{0}', space=vmem, size = 0x1000, scoped, tag = 'output window, operand 0, single buffered']
    #allocation8 [shape = 'u8[4096]{0}', space=vmem, size = 0x1000, scoped, tag = 'output window, operand 1, single buffered']
    #allocation9 [shape = 's32[1]{0}', space=sflag, size = 0x4, scoped, tag = 'scoped memory for tpu_custom_call.1']
    #allocation10 [shape = 'u8[4096]{0}', space=vmem, size = 0x1000, scoped, tag = 'output window, operand 2, single buffered']
    %11 = vsyncpa [#allocation3], 0
    %12 = vsyncpa [#allocation6], 0
    %13 = vsyncpa [#allocation4], 0
    %14 = vsyncpa [#allocation9], 0
    // Predicated region
    $region2: #{tpu_custom_call.1} parent=1 // pred_check
      _
    $region3: #{tpu_custom_call.1} parent=1 // pred_check_branch
      %16 = sbr.rel (0) target = $region5
    $region4: #{tpu_custom_call.1} parent=1 // pred_region
      %s18 = ssub.s32 128, 128
      %19 = vsyncadd [#allocation3], %s18
      %s20 = sshll.u32 [#allocation2], 4
      %s21 = int_to_ptr.vmem [resolvable:$true] %s20
      %26 = dma.hbm_to_vmem [thread:$0]  %s0, 128, %s21, [#allocation3], 64, 64, 4
    $region5: #{tpu_custom_call.1} parent=1 // pred_fallthru
      _
    // Predicated region
    $region6: #{tpu_custom_call.1} parent=1 // pred_check
      _
    $region7: #{tpu_custom_call.1} parent=1 // pred_check_branch
      %28 = sbr.rel (0) target = $region9
    $region8: #{tpu_custom_call.1} parent=1 // pred_region
      %s30 = ssub.s32 256, 256
      %31 = vsyncadd [#allocation6], %s30
      %s32 = sshll.u32 [#allocation5], 4
      %s33 = int_to_ptr.vmem [resolvable:$true] %s32
      %38 = dma.hbm_to_vmem [thread:$0]  %s1, 256, %s33, [#allocation6], 64, 64, 4
    $region9: #{tpu_custom_call.1} parent=1 // pred_fallthru
      _
    // Predicated region
    $region10: #{tpu_custom_call.1} parent=1 // pred_check
      _
    $region11: #{tpu_custom_call.1} parent=1 // pred_check_branch
      %40 = sbr.rel (0) target = $region13
    $region12: #{tpu_custom_call.1} parent=1 // pred_region
      _
    $region13: #{tpu_custom_call.1} parent=1 // pred_fallthru
      _
    // Predicated region
    $region14: #{tpu_custom_call.1} parent=1 // pred_check
      _
    $region15: #{tpu_custom_call.1} parent=1 // pred_check_branch
      %42 = sbr.rel (0) target = $region17
    $region16: #{tpu_custom_call.1} parent=1 // pred_region
      %43 = dma.done [#allocation3], 128
    $region17: #{tpu_custom_call.1} parent=1 // pred_fallthru
      _
    // Predicated region
    $region18: #{tpu_custom_call.1} parent=1 // pred_check
      _
    $region19: #{tpu_custom_call.1} parent=1 // pred_check_branch
      %45 = sbr.rel (0) target = $region21
    $region20: #{tpu_custom_call.1} parent=1 // pred_region
      %46 = dma.done [#allocation6], 256
    $region21: #{tpu_custom_call.1} parent=1 // pred_fallthru
      _
    %v48 = vld [vmem:[#allocation2] sm:$0xf]
    %v49 = vld [vmem:[#allocation2 + $0x4] sm:$0xf]
    %v50 = vld [vmem:[#allocation5] sm:$0xf]
    %v51 = vld [vmem:[#allocation5 + $0x4] sm:$0xf]
    %v52 = vld [vmem:[#allocation5 + $0x8] sm:$0xf]
    %v53 = vld [vmem:[#allocation5 + $0xc] sm:$0xf]
    %v54 = vld [vmem:[%s2] sm:$0x1]
    %v56 = vlaneseq
    %v57 = vshrl.u32 %v56, 7
    %v58 = vsub.s32 0, %v57
    %v59 = vrot.slane %v54, %v58
    %v63 = vunpack.c.l.b16 %v48
    %v64 = vunpack.c.l.b16 %v49
    %v65 = vpack.c.b16 %v64, %v63
    %v70 = vunpack.c.l.b16 %v50
    %v71 = vunpack.c.l.b16 %v51
    %v72 = vunpack.c.l.b16 %v52
    %v73 = vunpack.c.l.b16 %v53
    %v74 = vpack.c.b16 %v71, %v70
    %v75 = vpack.c.b16 %v73, %v72
    %vm78 = vcmask 261120
    %v80 = vsel %vm78, %v65, 0
    %82 = vmatprep.subr.bf16.mxu0 0
    %83 = vmatpush1.bf16.msra.mxu0 %v74
    %84 = vmatprep.subr.bf16.mxu0 0
    %85 = vmatpush1.bf16.msra.mxu0 %v75
    %86 = vmatprep.subr.bf16.mxu0 0
    %87 = vmatpush1.bf16.msra.mxu0 0
    %88 = vmatprep.subr.bf16.mxu0 0
    %89 = vmatpush1.bf16.msra.mxu0 0
    %90 = vmatprep.subr.bf16.mxu0 0
    %91 = vmatpush1.bf16.msra.mxu0 0
    %92 = vmatprep.subr.bf16.mxu0 0
    %93 = vmatpush1.bf16.msra.mxu0 0
    %94 = vmatprep.subr.bf16.mxu0 0
    %95 = vmatpush1.bf16.msra.mxu0 0
    %96 = vmatprep.subr.bf16.mxu0 0
    %97 = vmatpush1.bf16.msra.mxu0 0
    %98 = vmatprep.subr.bf16.mxu0 0
    %99 = vmatpush1.bf16.msra.mxu0 0
    %100 = vmatprep.subr.bf16.mxu0 0
    %101 = vmatpush1.bf16.msra.mxu0 0
    %102 = vmatprep.subr.bf16.mxu0 0
    %103 = vmatpush1.bf16.msra.mxu0 0
    %104 = vmatprep.subr.bf16.mxu0 0
    %105 = vmatpush1.bf16.msra.mxu0 0
    %106 = vmatprep.subr.bf16.mxu0 0
    %107 = vmatpush1.bf16.msra.mxu0 0
    %108 = vmatprep.subr.bf16.mxu0 0
    %109 = vmatpush1.bf16.msra.mxu0 0
    %110 = vmatprep.subr.bf16.mxu0 0
    %111 = vmatpush1.bf16.msra.mxu0 0
    %112 = vmatprep.subr.bf16.mxu0 0
    %113 = vmatpush1.bf16.msra.mxu0 0
    %114 = vmatprep.mubr.bf16.mxu0 0
    %115 = vmatmul.mubr.bf16.gmra.mrb[0].mxu0 %v80
    %v116 = vpop.f32.mrb[0].mxu0
    %v117 = vadd.f32 %v59, %v116
    %v118 = vpop.f32.mrb[0].mxu0
    %v119 = vpop.f32.mrb[0].mxu0
    %v120 = vadd.f32 %v59, %v119
    %v121 = vpop.f32.mrb[0].mxu0
    %122 = vdwg.mxu0
    %v123 = vpack.c.bf16 %v120, %v117
    %v125 = vunpack.c.l.b16 %v123
    %v126 = vunpack.c.h.b16 %v123
    %v127 = vpack.c.b16 %v125, %v125
    %v128 = vpack.c.b16 %v126, %v126
    %vm131 = vcmask 257024
    %132 = vst.msk [vmem:[#allocation7] sm:$0xf] %vm131, %v127
    %133 = vst.msk [vmem:[#allocation7 + $0x4] sm:$0xf] %vm131, %v128
    %134 = vrot.lane.b32.xlu0 %v127, 96
    %v135 = vpop.permute.xlu0 %134
    %136 = vrot.lane.b32.xlu0 %v128, 96
    %v137 = vpop.permute.xlu0 %136
    %140 = vst.msk [vmem:[#allocation8] sm:$0xf] %vm131, %v135
    %141 = vst.msk [vmem:[#allocation8 + $0x4] sm:$0xf] %vm131, %v137
    %142 = vrot.lane.b32.xlu0 %v127, 64
    %v143 = vpop.permute.xlu0 %142
    %144 = vrot.lane.b32.xlu0 %v128, 64
    %v145 = vpop.permute.xlu0 %144
    %148 = vst.msk [vmem:[#allocation10] sm:$0xf] %vm131, %v143
    %149 = vst.msk [vmem:[#allocation10 + $0x4] sm:$0xf] %vm131, %v145
    // Predicated region
    $region22: #{tpu_custom_call.1} parent=1 // pred_check
      _
    $region23: #{tpu_custom_call.1} parent=1 // pred_check_branch
      %151 = sbr.rel (0) target = $region25
    $region24: #{tpu_custom_call.1} parent=1 // pred_region
      %s153 = ssub.s32 128, 128
      %154 = vsyncadd [#allocation4], %s153
      %s155 = sshll.u32 [#allocation7], 4
      %s156 = int_to_ptr.vmem [resolvable:$true] %s155
      %161 = dma.vmem_to_hbm [thread:$0]  %s156, 128, %s3, [#allocation4], 64, 64, 4
    $region25: #{tpu_custom_call.1} parent=1 // pred_fallthru
      _
    // Predicated region
    $region26: #{tpu_custom_call.1} parent=1 // pred_check
      _
    $region27: #{tpu_custom_call.1} parent=1 // pred_check_branch
      %163 = sbr.rel (0) target = $region29
    $region28: #{tpu_custom_call.1} parent=1 // pred_region
      %s165 = ssub.s32 128, 128
      %166 = vsyncadd [#allocation9], %s165
      %s167 = sshll.u32 [#allocation8], 4
      %s168 = int_to_ptr.vmem [resolvable:$true] %s167
      %173 = dma.vmem_to_hbm [thread:$0]  %s168, 128, %s4, [#allocation9], 64, 64, 4
    $region29: #{tpu_custom_call.1} parent=1 // pred_fallthru
      _
    // Predicated region
    $region30: #{tpu_custom_call.1} parent=1 // pred_check
      _
    $region31: #{tpu_custom_call.1} parent=1 // pred_check_branch
      %175 = sbr.rel (0) target = $region33
    $region32: #{tpu_custom_call.1} parent=1 // pred_region
      %s177 = ssub.s32 128, 128
      %178 = vsyncadd [#allocation9], %s177
      %s179 = sshll.u32 [#allocation10], 4
      %s180 = int_to_ptr.vmem [resolvable:$true] %s179
      %185 = dma.vmem_to_hbm [thread:$0]  %s180, 128, %s5, [#allocation9], 64, 64, 4
    $region33: #{tpu_custom_call.1} parent=1 // pred_fallthru
      _
    // Predicated region
    $region34: #{tpu_custom_call.1} parent=1 // pred_check
      _
    $region35: #{tpu_custom_call.1} parent=1 // pred_check_branch
      %187 = sbr.rel (0) target = $region37
    $region36: #{tpu_custom_call.1} parent=1 // pred_region
      %188 = dma.done [#allocation4], 128
    $region37: #{tpu_custom_call.1} parent=1 // pred_fallthru
      _
    // Predicated region
    $region38: #{tpu_custom_call.1} parent=1 // pred_check
      _
    $region39: #{tpu_custom_call.1} parent=1 // pred_check_branch
      %190 = sbr.rel (0) target = $region41
    $region40: #{tpu_custom_call.1} parent=1 // pred_region
      %191 = dma.done [#allocation9], 128
    $region41: #{tpu_custom_call.1} parent=1 // pred_fallthru
      _
    // Predicated region
    $region42: #{tpu_custom_call.1} parent=1 // pred_check
      _
    $region43: #{tpu_custom_call.1} parent=1 // pred_check_branch
      %193 = sbr.rel (0) target = $region45
    $region44: #{tpu_custom_call.1} parent=1 // pred_region
      %194 = dma.done [#allocation9], 128
    $region45: #{tpu_custom_call.1} parent=1 // pred_fallthru
      _
    %195 = vsyncpa [#allocation3], 1
    %196 = vsyncpa [#allocation6], 1
    %197 = vsyncpa [#allocation4], 1
    %198 = vsyncpa [#allocation9], 1

</llo_original>
